<compile_context>
chip_gen: v6e
topology: v6e:2x2x1
jax: 0.10.0
libtpu: 0.0.40
codegen_flags: <defaults>
</compile_context>

<pallas_src>
import functools

import jax
import jax.numpy as jnp
from jax import lax
from jax.experimental import pallas as pl
from jax.experimental.pallas import tpu as pltpu


def _gradupdate2_kernel(patch_ref, pc_ref, wg_ref, bg_ref, wc_ref,
                        grad_ref, hid_ref, cell_ref):
    """One (batch, column-block) tile, channel-major / lane-dense.

    patch_ref: (K, R)        im2col patch, K = 9*(C+Chid), R = spatial columns
    pc_ref:    (Chid, R)     previous cell state
    wg_ref:    (4*Chid, K)   flattened ConvLSTM gate weights
    bg_ref:    (4*Chid, 1)   gate bias
    wc_ref:    (Cout, Chid)  1x1 ConvGrad weight
    outputs:   grad (Cout,R), hidden (Chid,R), cell (Chid,R)
    """
    Chid = pc_ref.shape[0]

    # Single K=9*Cs matmul on the MXU (replaces 9 shifted K=Cs matmuls).
    gates = jnp.dot(wg_ref[...], patch_ref[...],
                    preferred_element_type=jnp.float32) + bg_ref[...]

    # Gate order matches torch .chunk(4, dim=1): in, remember, out, cell.
    in_gate = jax.nn.sigmoid(gates[0 * Chid:1 * Chid, :])
    rem_gate = jax.nn.sigmoid(gates[1 * Chid:2 * Chid, :])
    out_gate = jax.nn.sigmoid(gates[2 * Chid:3 * Chid, :])
    cell_gate = jnp.tanh(gates[3 * Chid:4 * Chid, :])

    prev_cell = pc_ref[...].astype(jnp.float32)
    cell = rem_gate * prev_cell + in_gate * cell_gate
    hidden = out_gate * jnp.tanh(cell)

    # Dropout (rate 0.0, eval) -> identity; 1x1 conv == (Cout,Chid)x(Chid,R) dot.
    grad_out = jnp.dot(wc_ref[...].astype(jnp.float32), hidden,
                       preferred_element_type=jnp.float32)

    grad_ref[...] = grad_out.astype(grad_ref.dtype)
    hid_ref[...] = hidden.astype(hid_ref.dtype)
    cell_ref[...] = cell.astype(cell_ref.dtype)


def prepare_gradupdate2_params(params):
    """One-time weight layout conversion (hoisted out of the per-call path).

    params:
      'wg': (4*DimState, C+DimState, 3, 3)  ConvLSTM2d Gates weight (OIHW)
      'bg': (4*DimState,)                   ConvLSTM2d Gates bias
      'wc': (C, DimState, 1, 1)             1x1 ConvGrad weight (OIHW, no bias)
    """
    wg = params['wg']
    G4, Cs, KH, KW = wg.shape
    # Column ordering: (dh, dw) outer, input-channel inner -> matches im2col.
    wg_flat = jnp.transpose(wg, (0, 2, 3, 1)).reshape(G4, KH * KW * Cs)
    bg = params['bg'].reshape(G4, 1)
    wc = params['wc'][:, :, 0, 0]                      # (Cout, Chid)
    return {'wg_flat': wg_flat, 'bg': bg, 'wc': wc}


def _pick_block_cols(hw, max_cols=2048):
    """Largest 128-multiple divisor of hw (<= max_cols) when hw is big."""
    if hw <= max_cols:
        return hw
    for cand in range(max_cols - max_cols % 128, 127, -128):
        if hw % cand == 0:
            return cand
    return hw


def model_gradupdate2_forward(hidden, cell, grad, prepared, gradnorm=1.0):
    """NCHW interface mirroring model_GradUpdate2.forward (len(ShapeData)==3).

    hidden, cell: (B, DimState, H, W) or None
    grad:         (B, C, H, W)
    prepared:     output of prepare_gradupdate2_params
    Returns (grad_out, hidden, cell) in NCHW, in grad.dtype.
    """
    B, C, H, W = grad.shape
    G4, K = prepared['wg_flat'].shape
    Cout, Chid = prepared['wc'].shape
    HW = H * W
    dtype = grad.dtype

    if hidden is None or cell is None:
        hidden = jnp.zeros((B, Chid, H, W), dtype)
        cell = jnp.zeros((B, Chid, H, W), dtype)

    # grad/gradnorm, channel concat, halo pad and the im2col build all fuse into
    # the single XLA producer of `patch`; no NCHW<->NHWC transposes anywhere.
    # TODO(synk): for very large H*W, build the im2col patch in-kernel from the
    # padded stacked input to avoid the 9x HBM amplification of this buffer.
    g = grad * (1.0 / gradnorm)
    stacked = jnp.concatenate([g, hidden.astype(dtype)], axis=1)   # (B, Cs, H, W)
    padded = jnp.pad(stacked, ((0, 0), (0, 0), (1, 1), (1, 1)))
    patch = jnp.concatenate(
        [padded[:, :, dh:dh + H, dw:dw + W].reshape(B, C + Chid, HW)
         for dh in range(3) for dw in range(3)], axis=1)           # (B, K, HW)
    prev_cell = cell.reshape(B, Chid, HW)

    bc = _pick_block_cols(HW)
    n_col_blocks = HW // bc

    grad_o, hid_o, cell_o = pl.pallas_call(
        _gradupdate2_kernel,
        grid=(B, n_col_blocks),
        in_specs=[
            pl.BlockSpec((None, K, bc), lambda b, j: (b, 0, j)),
            pl.BlockSpec((None, Chid, bc), lambda b, j: (b, 0, j)),
            pl.BlockSpec((G4, K), lambda b, j: (0, 0)),
            pl.BlockSpec((G4, 1), lambda b, j: (0, 0)),
            pl.BlockSpec((Cout, Chid), lambda b, j: (0, 0)),
        ],
        out_specs=[
            pl.BlockSpec((None, Cout, bc), lambda b, j: (b, 0, j)),
            pl.BlockSpec((None, Chid, bc), lambda b, j: (b, 0, j)),
            pl.BlockSpec((None, Chid, bc), lambda b, j: (b, 0, j)),
        ],
        out_shape=[
            jax.ShapeDtypeStruct((B, Cout, HW), dtype),
            jax.ShapeDtypeStruct((B, Chid, HW), dtype),
            jax.ShapeDtypeStruct((B, Chid, HW), dtype),
        ],
        compiler_params=pltpu.CompilerParams(
            dimension_semantics=("parallel", "parallel")),
    )(patch, prev_cell, prepared['wg_flat'], prepared['bg'], prepared['wc'])

    # Lane-dense (B, C, H*W) outputs -> NCHW via free reshapes (no transpose).
    return (grad_o.reshape(B, Cout, H, W),
            hid_o.reshape(B, Chid, H, W),
            cell_o.reshape(B, Chid, H, W))


def _reference_forward(hidden, cell, grad, params, gradnorm=1.0):
    """Pure-JAX NCHW reference mirroring the PyTorch module (for validation)."""
    g = grad / gradnorm
    stacked = jnp.concatenate([g, hidden], axis=1)
    gates = lax.conv_general_dilated(
        stacked, params['wg'], (1, 1), 'SAME',
        dimension_numbers=('NCHW', 'OIHW', 'NCHW'))
    gates = gates + params['bg'][None, :, None, None]
    ig, rg, og, cg = jnp.split(gates, 4, axis=1)
    ig, rg, og = jax.nn.sigmoid(ig), jax.nn.sigmoid(rg), jax.nn.sigmoid(og)
    cg = jnp.tanh(cg)
    cell_n = rg * cell + ig * cg
    hidden_n = og * jnp.tanh(cell_n)
    grad_out = lax.conv_general_dilated(
        hidden_n, params['wc'], (1, 1), 'VALID',
        dimension_numbers=('NCHW', 'OIHW', 'NCHW'))
    return grad_out, hidden_n, cell_n


if __name__ == "__main__":
    # ShapeData = (C, H, W) -> len 3 -> ConvLSTM2d path; DimState = 5 * C.
    B, C, H, W = 2, 4, 16, 16
    Chid = 5 * C
    Cs = C + Chid
    G4 = 4 * Chid

    key = jax.random.PRNGKey(0)
    k1, k2, k3, k4, k5, k6 = jax.random.split(key, 6)

    # Deterministic "default-init-like" parameters (uniform +- 1/sqrt(fan_in)).
    fan_g = Cs * 3 * 3
    fan_c = Chid
    params = {
        'wg': jax.random.uniform(k1, (G4, Cs, 3, 3), jnp.float32,
                                 -fan_g ** -0.5, fan_g ** -0.5),
        'bg': jax.random.uniform(k2, (G4,), jnp.float32,
                                 -fan_g ** -0.5, fan_g ** -0.5),
        'wc': jax.random.uniform(k3, (C, Chid, 1, 1), jnp.float32,
                                 -fan_c ** -0.5, fan_c ** -0.5),
    }
    # Unused extras of the module (alphaObs, alphaAE, WObs, WAE, the stray K on
    # the Sequential) do not participate in forward(); not materialized here.

    grad = jax.random.normal(k4, (B, C, H, W), jnp.float32)
    hidden = jax.random.normal(k5, (B, Chid, H, W), jnp.float32) * 0.1
    cell = jax.random.normal(k6, (B, Chid, H, W), jnp.float32) * 0.1
    gradnorm = 2.0

    # One-time weight layout conversion (hoisted out of the per-call path).
    prepared = jax.tree_util.tree_map(jnp.asarray,
                                      prepare_gradupdate2_params(params))

    fwd = jax.jit(functools.partial(model_gradupdate2_forward,
                                    gradnorm=gradnorm))
    g_out, h_out, c_out = fwd(hidden, cell, grad, prepared)
    jax.block_until_ready((g_out, h_out, c_out))

    g_ref, h_ref, c_ref = _reference_forward(hidden, cell, grad, params, gradnorm)
    assert jnp.allclose(g_out, g_ref, rtol=1e-4, atol=1e-4)
    assert jnp.allclose(h_out, h_ref, rtol=1e-4, atol=1e-4)
    assert jnp.allclose(c_out, c_ref, rtol=1e-4, atol=1e-4)

    # TODO(synk): periodicBnd=True wrap-around path not implemented (references
    # an undefined `x` in the original source; default periodicBnd=False used).
    print("KERNEL_OK")
</pallas_src>

<mosaic_0001>
module attributes {stable_mosaic.version = 11 : i64} {
  func.func @_gradupdate2_kernel(%arg0: i32, %arg1: i32, %arg2: memref<1x216x256xf32, #tpu.memory_space<vmem>>, %arg3: memref<1x20x256xf32, #tpu.memory_space<vmem>>, %arg4: memref<80x216xf32, #tpu.memory_space<vmem>>, %arg5: memref<80x1xf32, #tpu.memory_space<vmem>>, %arg6: memref<4x20xf32, #tpu.memory_space<vmem>>, %arg7: memref<1x4x256xf32, #tpu.memory_space<vmem>>, %arg8: memref<1x20x256xf32, #tpu.memory_space<vmem>>, %arg9: memref<1x20x256xf32, #tpu.memory_space<vmem>>) attributes {dimension_semantics = [#tpu.dimension_semantics<parallel>, #tpu.dimension_semantics<parallel>], iteration_bounds = array<i64: 2, 1>, scalar_prefetch = 0 : i64, scratch_operands = 0 : i64, tpu.core_type = #tpu.core_type<tc>, window_params = [{transform_indices = @transform_0, window_bounds = array<i64: 1, 216, 256>}, {transform_indices = @transform_1, window_bounds = array<i64: 1, 20, 256>}, {pipeline_mode = #tpu.pipeline_mode<synchronous>, transform_indices = @transform_2, window_bounds = array<i64: 80, 216>}, {pipeline_mode = #tpu.pipeline_mode<synchronous>, transform_indices = @transform_3, window_bounds = array<i64: 80, 1>}, {pipeline_mode = #tpu.pipeline_mode<synchronous>, transform_indices = @transform_4, window_bounds = array<i64: 4, 20>}, {transform_indices = @transform_5, window_bounds = array<i64: 1, 4, 256>}, {transform_indices = @transform_6, window_bounds = array<i64: 1, 20, 256>}, {transform_indices = @transform_7, window_bounds = array<i64: 1, 20, 256>}]} {
    %c0 = arith.constant 0 : index
    %c0_0 = arith.constant 0 : index
    %0 = vector.load %arg4[%c0, %c0_0] : memref<80x216xf32, #tpu.memory_space<vmem>>, vector<80x216xf32>
    %c0_1 = arith.constant 0 : index
    %c0_2 = arith.constant 0 : index
    %c0_3 = arith.constant 0 : index
    %1 = vector.load %arg2[%c0_1, %c0_2, %c0_3] : memref<1x216x256xf32, #tpu.memory_space<vmem>>, vector<1x216x256xf32>
    %2 = vector.shape_cast %1 : vector<1x216x256xf32> to vector<216x256xf32>
    %cst = arith.constant dense<0.000000e+00> : vector<80x256xf32>
    %3 = tpu.matmul %0, %2, %cst {dimension_numbers = #tpu.dot_dimension_numbers<[1], [0], [0], [1], [0, 0, 1, 1], [], []>} : vector<80x216xf32>, vector<216x256xf32>, vector<80x256xf32> -> vector<80x256xf32>
    %c0_4 = arith.constant 0 : index
    %c0_5 = arith.constant 0 : index
    %4 = vector.load %arg5[%c0_4, %c0_5] : memref<80x1xf32, #tpu.memory_space<vmem>>, vector<80x1xf32>
    %5 = vector.broadcast %4 : vector<80x1xf32> to vector<80x256xf32>
    %6 = arith.addf %3, %5 : vector<80x256xf32>
    %7 = vector.extract_strided_slice %6 {offsets = [0, 0], sizes = [20, 256], strides = [1, 1]} : vector<80x256xf32> to vector<20x256xf32>
    %8 = arith.negf %7 : vector<20x256xf32>
    %9 = math.exp %8 : vector<20x256xf32>
    %cst_6 = arith.constant 1.000000e+00 : f32
    %10 = vector.broadcast %cst_6 : f32 to vector<20x256xf32>
    %11 = arith.addf %10, %9 : vector<20x256xf32>
    %12 = arith.divf %10, %11 : vector<20x256xf32>
    %13 = vector.extract_strided_slice %6 {offsets = [20, 0], sizes = [20, 256], strides = [1, 1]} : vector<80x256xf32> to vector<20x256xf32>
    %14 = arith.negf %13 : vector<20x256xf32>
    %15 = math.exp %14 : vector<20x256xf32>
    %cst_7 = arith.constant 1.000000e+00 : f32
    %16 = vector.broadcast %cst_7 : f32 to vector<20x256xf32>
    %17 = arith.addf %16, %15 : vector<20x256xf32>
    %18 = arith.divf %16, %17 : vector<20x256xf32>
    %19 = vector.extract_strided_slice %6 {offsets = [40, 0], sizes = [20, 256], strides = [1, 1]} : vector<80x256xf32> to vector<20x256xf32>
    %20 = arith.negf %19 : vector<20x256xf32>
    %21 = math.exp %20 : vector<20x256xf32>
    %cst_8 = arith.constant 1.000000e+00 : f32
    %22 = vector.broadcast %cst_8 : f32 to vector<20x256xf32>
    %23 = arith.addf %22, %21 : vector<20x256xf32>
    %24 = arith.divf %22, %23 : vector<20x256xf32>
    %25 = vector.extract_strided_slice %6 {offsets = [60, 0], sizes = [20, 256], strides = [1, 1]} : vector<80x256xf32> to vector<20x256xf32>
    %26 = math.tanh %25 : vector<20x256xf32>
    %c0_9 = arith.constant 0 : index
    %c0_10 = arith.constant 0 : index
    %c0_11 = arith.constant 0 : index
    %27 = vector.load %arg3[%c0_9, %c0_10, %c0_11] : memref<1x20x256xf32, #tpu.memory_space<vmem>>, vector<1x20x256xf32>
    %28 = vector.shape_cast %27 : vector<1x20x256xf32> to vector<20x256xf32>
    %29 = arith.mulf %18, %28 : vector<20x256xf32>
    %30 = arith.mulf %12, %26 : vector<20x256xf32>
    %31 = arith.addf %29, %30 : vector<20x256xf32>
    %32 = math.tanh %31 : vector<20x256xf32>
    %33 = arith.mulf %24, %32 : vector<20x256xf32>
    %c0_12 = arith.constant 0 : index
    %c0_13 = arith.constant 0 : index
    %34 = vector.load %arg6[%c0_12, %c0_13] : memref<4x20xf32, #tpu.memory_space<vmem>>, vector<4x20xf32>
    %cst_14 = arith.constant dense<0.000000e+00> : vector<4x256xf32>
    %35 = tpu.matmul %34, %33, %cst_14 {dimension_numbers = #tpu.dot_dimension_numbers<[1], [0], [0], [1], [0, 0, 1, 1], [], []>} : vector<4x20xf32>, vector<20x256xf32>, vector<4x256xf32> -> vector<4x256xf32>
    %c0_15 = arith.constant 0 : index
    %c0_16 = arith.constant 0 : index
    %c0_17 = arith.constant 0 : index
    %36 = vector.load %arg7[%c0_15, %c0_16, %c0_17] : memref<1x4x256xf32, #tpu.memory_space<vmem>>, vector<1x4x256xf32>
    %37 = vector.shape_cast %36 : vector<1x4x256xf32> to vector<4x256xf32>
    %38 = vector.shape_cast %35 : vector<4x256xf32> to vector<1x4x256xf32>
    tpu.vector_store %arg7[%c0_15, %c0_16, %c0_17], %38 {strides = array<i32>} : memref<1x4x256xf32, #tpu.memory_space<vmem>>, vector<1x4x256xf32>,
    %c0_18 = arith.constant 0 : index
    %c0_19 = arith.constant 0 : index
    %c0_20 = arith.constant 0 : index
    %39 = vector.load %arg8[%c0_18, %c0_19, %c0_20] : memref<1x20x256xf32, #tpu.memory_space<vmem>>, vector<1x20x256xf32>
    %40 = vector.shape_cast %39 : vector<1x20x256xf32> to vector<20x256xf32>
    %41 = vector.shape_cast %33 : vector<20x256xf32> to vector<1x20x256xf32>
    tpu.vector_store %arg8[%c0_18, %c0_19, %c0_20], %41 {strides = array<i32>} : memref<1x20x256xf32, #tpu.memory_space<vmem>>, vector<1x20x256xf32>,
    %c0_21 = arith.constant 0 : index
    %c0_22 = arith.constant 0 : index
    %c0_23 = arith.constant 0 : index
    %42 = vector.load %arg9[%c0_21, %c0_22, %c0_23] : memref<1x20x256xf32, #tpu.memory_space<vmem>>, vector<1x20x256xf32>
    %43 = vector.shape_cast %42 : vector<1x20x256xf32> to vector<20x256xf32>
    %44 = vector.shape_cast %31 : vector<20x256xf32> to vector<1x20x256xf32>
    tpu.vector_store %arg9[%c0_21, %c0_22, %c0_23], %44 {strides = array<i32>} : memref<1x20x256xf32, #tpu.memory_space<vmem>>, vector<1x20x256xf32>,
    return
  }
  func.func @transform_0(%arg0: i32, %arg1: i32) -> (i32, i32, i32) {
    %c0_i32 = arith.constant 0 : i32
    %c0_i32_0 = arith.constant 0 : i32
    return %arg0, %c0_i32, %arg1 : i32, i32, i32
  }
  func.func @transform_1(%arg0: i32, %arg1: i32) -> (i32, i32, i32) {
    %c0_i32 = arith.constant 0 : i32
    %c0_i32_0 = arith.constant 0 : i32
    return %arg0, %c0_i32, %arg1 : i32, i32, i32
  }
  func.func @transform_2(%arg0: i32, %arg1: i32) -> (i32, i32) {
    %c0_i32 = arith.constant 0 : i32
    %c0_i32_0 = arith.constant 0 : i32
    %c0_i32_1 = arith.constant 0 : i32
    return %c0_i32, %c0_i32_0 : i32, i32
  }
  func.func @transform_3(%arg0: i32, %arg1: i32) -> (i32, i32) {
    %c0_i32 = arith.constant 0 : i32
    %c0_i32_0 = arith.constant 0 : i32
    %c0_i32_1 = arith.constant 0 : i32
    return %c0_i32, %c0_i32_0 : i32, i32
  }
  func.func @transform_4(%arg0: i32, %arg1: i32) -> (i32, i32) {
    %c0_i32 = arith.constant 0 : i32
    %c0_i32_0 = arith.constant 0 : i32
    %c0_i32_1 = arith.constant 0 : i32
    return %c0_i32, %c0_i32_0 : i32, i32
  }
  func.func @transform_5(%arg0: i32, %arg1: i32) -> (i32, i32, i32) {
    %c0_i32 = arith.constant 0 : i32
    %c0_i32_0 = arith.constant 0 : i32
    return %arg0, %c0_i32, %arg1 : i32, i32, i32
  }
  func.func @transform_6(%arg0: i32, %arg1: i32) -> (i32, i32, i32) {
    %c0_i32 = arith.constant 0 : i32
    %c0_i32_0 = arith.constant 0 : i32
    return %arg0, %c0_i32, %arg1 : i32, i32, i32
  }
  func.func @transform_7(%arg0: i32, %arg1: i32) -> (i32, i32, i32) {
    %c0_i32 = arith.constant 0 : i32
    %c0_i32_0 = arith.constant 0 : i32
    return %arg0, %c0_i32, %arg1 : i32, i32, i32
  }
}

</mosaic_0001>

<llo_original>
// kernel: model_gradupdate2_forward.1
$region0: #{model_gradupdate2_forward.1}
  #allocation0 [shape = 'u32[]', space=smem, size = 0x4, offset = 0x4, fixed_abs, tag = 'smem constant byte address 0x4 - core index']
  #allocation1 [shape = 'u32[144,128]{1,0:T(1,128)}', space=vmem, size = 0x12000, scoped, tag = 'internal scratch']
  %s0 = inlined_call_operand.vmem [shape: f32[2,216,256], index: 0, kind: input, shape index: {}]
  %s1 = inlined_call_operand.vmem [shape: f32[2,20,256], index: 1, kind: input, shape index: {}]
  %s2 = inlined_call_operand.vmem [shape: f32[80,216], index: 2, kind: input, shape index: {}]
  %s3 = inlined_call_operand.vmem [shape: f32[80,1], index: 3, kind: input, shape index: {}]
  %s4 = inlined_call_operand.vmem [shape: f32[4,20], index: 4, kind: input, shape index: {}]
  %s5 = inlined_call_operand.vmem [shape: f32[2,4,256], index: 5, kind: output, shape index: {0}]
  %s6 = inlined_call_operand.vmem [shape: f32[2,20,256], index: 6, kind: output, shape index: {1}]
  %s7 = inlined_call_operand.vmem [shape: f32[2,20,256], index: 7, kind: output, shape index: {2}]
  %8 = xla_tuple %s5, %s6, %s7
  %s9 = sld [smem:[#allocation0]]
  $region69: #{model_gradupdate2_forward.1} parent=0
    _
  %s11 = ssub.s32 1, %s9
  %s12 = scalar_select 0, %s11, %s9
  loop: start=0, step=1, limit=4
  $region2: #{model_gradupdate2_forward.1} parent=0 // loop_pre_header
    _
  $region3: #{model_gradupdate2_forward.1} parent=0 // loop_header
    %s14 = sphi 0, %s18
    %p15 = scmp.ge.s32.totalorder %s14, 4
    %s21 = sphi 0, %s33
    %s22 = sphi 0, %s29
    %s23 = sphi 0, %s21
    %s24 = sphi 0, %s22
    %s25 = sphi 0, %s23
    %s26 = sphi 0, %s24
    %s38 = sphi 0, %s40
    %s41 = sphi 0, %s38
    %s42 = sphi 0, %s41
    %s58 = sphi 0, %s42
    %s66 = sphi 0, %s68
    %s69 = sphi 0, %s66
    %s70 = sphi 0, %s69
    %s86 = sphi 0, %s70
    %s90 = sphi 0, %s90
    %s92 = sphi 0, %s90
    %s93 = sphi 0, %s92
    %s107 = sphi 0, %s93
    %s111 = sphi 0, %s111
    %s113 = sphi 0, %s111
    %s114 = sphi 0, %s113
    %s128 = sphi 0, %s114
    %s132 = sphi 0, %s132
    %s134 = sphi 0, %s132
    %s135 = sphi 0, %s134
    %s149 = sphi 0, %s135
    %s157 = sphi 0, %s159
    %s160 = sphi 0, %s157
    %s161 = sphi 0, %s160
    %s177 = sphi 0, %s161
    %s185 = sphi 0, %s187
    %s188 = sphi 0, %s185
    %s189 = sphi 0, %s188
    %s205 = sphi 0, %s189
    %s213 = sphi 0, %s215
    %s216 = sphi 0, %s213
    %s217 = sphi 0, %s216
    %s233 = sphi 0, %s217
  $region4: #{model_gradupdate2_forward.1} parent=0 // loop_header_branch
    %17 = sbr.rel (%p15) target = $region8
  $region5: #{model_gradupdate2_forward.1} parent=0 // loop_body
    %s19 = ssub.s32 %s14, 1
    %s20 = ssub.s32 %s14, 2
    %s27 = sadd.s32 1, %s22
    %p28 = scmp.ge.s32.totalorder %s27, 1
    %s29 = scalar_select %p28, 0, %s27
    %s30 = sadd.s32 1, %s21
    %s31 = scalar_select %p28, %s30, %s21
    %p32 = scmp.ge.s32.totalorder %s31, 2
    %s33 = scalar_select %p32, 0, %s31
    %s34 = ssub.s32 %s21, %s33
    %s35 = ssub.s32 %s22, %s29
    %s36 = sor.u32 %s34, %s35
    %p37 = scmp.eq.s32.totalorder %s36, 0
    %s39 = sadd.s32 %s38, 1
    %s40 = scalar_select %p37, %s38, %s39
    %p43 = pneg %p37
    %p44 = scmp.eq.s32.totalorder %s14, 1
    %p45 = por %p43, %p44
    %p46 = scmp.ne.s32.totalorder %s38, %s41
    %p47 = scmp.eq.s32.totalorder %s14, 0
    %p48 = por %p46, %p47
    %p49 = scmp.ne.s32.totalorder %s38, %s41
    %p50 = scmp.eq.s32.totalorder %s19, 1
    %p51 = por %p49, %p50
    %p52 = scmp.ne.s32.totalorder %s41, %s42
    %p53 = scmp.eq.s32.totalorder %s19, 0
    %p54 = por %p52, %p53
    %p55 = scmp.ne.s32.totalorder %s41, %s42
    %p56 = scmp.eq.s32.totalorder %s20, 1
    %p57 = por %p55, %p56
    %p59 = scmp.ne.s32.totalorder %s42, %s58
    %p60 = scmp.eq.s32.totalorder %s20, 0
    %p61 = por %p59, %p60
    %s62 = ssub.s32 %s21, %s33
    %s63 = ssub.s32 %s22, %s29
    %s64 = sor.u32 %s62, %s63
    %p65 = scmp.eq.s32.totalorder %s64, 0
    %s67 = sadd.s32 %s66, 1
    %s68 = scalar_select %p65, %s66, %s67
    %p71 = pneg %p65
    %p72 = scmp.eq.s32.totalorder %s14, 1
    %p73 = por %p71, %p72
    %p74 = scmp.ne.s32.totalorder %s66, %s69
    %p75 = scmp.eq.s32.totalorder %s14, 0
    %p76 = por %p74, %p75
    %p77 = scmp.ne.s32.totalorder %s66, %s69
    %p78 = scmp.eq.s32.totalorder %s19, 1
    %p79 = por %p77, %p78
    %p80 = scmp.ne.s32.totalorder %s69, %s70
    %p81 = scmp.eq.s32.totalorder %s19, 0
    %p82 = por %p80, %p81
    %p83 = scmp.ne.s32.totalorder %s69, %s70
    %p84 = scmp.eq.s32.totalorder %s20, 1
    %p85 = por %p83, %p84
    %p87 = scmp.ne.s32.totalorder %s70, %s86
    %p88 = scmp.eq.s32.totalorder %s20, 0
    %p89 = por %p87, %p88
    %s91 = sadd.s32 %s90, 1
    %p94 = scmp.eq.s32.totalorder %s14, 1
    %p95 = scmp.ne.s32.totalorder %s90, %s92
    %p96 = scmp.eq.s32.totalorder %s14, 0
    %p97 = por %p95, %p96
    %p98 = scmp.ne.s32.totalorder %s90, %s92
    %p99 = scmp.eq.s32.totalorder %s19, 1
    %p100 = por %p98, %p99
    %p101 = scmp.ne.s32.totalorder %s92, %s93
    %p102 = scmp.eq.s32.totalorder %s19, 0
    %p103 = por %p101, %p102
    %p104 = scmp.ne.s32.totalorder %s92, %s93
    %p105 = scmp.eq.s32.totalorder %s20, 1
    %p106 = por %p104, %p105
    %p108 = scmp.ne.s32.totalorder %s93, %s107
    %p109 = scmp.eq.s32.totalorder %s20, 0
    %p110 = por %p108, %p109
    %s112 = sadd.s32 %s111, 1
    %p115 = scmp.eq.s32.totalorder %s14, 1
    %p116 = scmp.ne.s32.totalorder %s111, %s113
    %p117 = scmp.eq.s32.totalorder %s14, 0
    %p118 = por %p116, %p117
    %p119 = scmp.ne.s32.totalorder %s111, %s113
    %p120 = scmp.eq.s32.totalorder %s19, 1
    %p121 = por %p119, %p120
    %p122 = scmp.ne.s32.totalorder %s113, %s114
    %p123 = scmp.eq.s32.totalorder %s19, 0
    %p124 = por %p122, %p123
    %p125 = scmp.ne.s32.totalorder %s113, %s114
    %p126 = scmp.eq.s32.totalorder %s20, 1
    %p127 = por %p125, %p126
    %p129 = scmp.ne.s32.totalorder %s114, %s128
    %p130 = scmp.eq.s32.totalorder %s20, 0
    %p131 = por %p129, %p130
    %s133 = sadd.s32 %s132, 1
    %p136 = scmp.eq.s32.totalorder %s14, 1
    %p137 = scmp.ne.s32.totalorder %s132, %s134
    %p138 = scmp.eq.s32.totalorder %s14, 0
    %p139 = por %p137, %p138
    %p140 = scmp.ne.s32.totalorder %s132, %s134
    %p141 = scmp.eq.s32.totalorder %s19, 1
    %p142 = por %p140, %p141
    %p143 = scmp.ne.s32.totalorder %s134, %s135
    %p144 = scmp.eq.s32.totalorder %s19, 0
    %p145 = por %p143, %p144
    %p146 = scmp.ne.s32.totalorder %s134, %s135
    %p147 = scmp.eq.s32.totalorder %s20, 1
    %p148 = por %p146, %p147
    %p150 = scmp.ne.s32.totalorder %s135, %s149
    %p151 = scmp.eq.s32.totalorder %s20, 0
    %p152 = por %p150, %p151
    %s153 = ssub.s32 %s21, %s33
    %s154 = ssub.s32 %s22, %s29
    %s155 = sor.u32 %s153, %s154
    %p156 = scmp.eq.s32.totalorder %s155, 0
    %s158 = sadd.s32 %s157, 1
    %s159 = scalar_select %p156, %s157, %s158
    %p162 = pneg %p156
    %p163 = scmp.eq.s32.totalorder %s14, 1
    %p164 = por %p162, %p163
    %p165 = scmp.ne.s32.totalorder %s157, %s160
    %p166 = scmp.eq.s32.totalorder %s14, 0
    %p167 = por %p165, %p166
    %p168 = scmp.ne.s32.totalorder %s157, %s160
    %p169 = scmp.eq.s32.totalorder %s19, 1
    %p170 = por %p168, %p169
    %p171 = scmp.ne.s32.totalorder %s160, %s161
    %p172 = scmp.eq.s32.totalorder %s19, 0
    %p173 = por %p171, %p172
    %p174 = scmp.ne.s32.totalorder %s160, %s161
    %p175 = scmp.eq.s32.totalorder %s20, 1
    %p176 = por %p174, %p175
    %p178 = scmp.ne.s32.totalorder %s161, %s177
    %p179 = scmp.eq.s32.totalorder %s20, 0
    %p180 = por %p178, %p179
    %s181 = ssub.s32 %s21, %s33
    %s182 = ssub.s32 %s22, %s29
    %s183 = sor.u32 %s181, %s182
    %p184 = scmp.eq.s32.totalorder %s183, 0
    %s186 = sadd.s32 %s185, 1
    %s187 = scalar_select %p184, %s185, %s186
    %p190 = pneg %p184
    %p191 = scmp.eq.s32.totalorder %s14, 1
    %p192 = por %p190, %p191
    %p193 = scmp.ne.s32.totalorder %s185, %s188
    %p194 = scmp.eq.s32.totalorder %s14, 0
    %p195 = por %p193, %p194
    %p196 = scmp.ne.s32.totalorder %s185, %s188
    %p197 = scmp.eq.s32.totalorder %s19, 1
    %p198 = por %p196, %p197
    %p199 = scmp.ne.s32.totalorder %s188, %s189
    %p200 = scmp.eq.s32.totalorder %s19, 0
    %p201 = por %p199, %p200
    %p202 = scmp.ne.s32.totalorder %s188, %s189
    %p203 = scmp.eq.s32.totalorder %s20, 1
    %p204 = por %p202, %p203
    %p206 = scmp.ne.s32.totalorder %s189, %s205
    %p207 = scmp.eq.s32.totalorder %s20, 0
    %p208 = por %p206, %p207
    %s209 = ssub.s32 %s21, %s33
    %s210 = ssub.s32 %s22, %s29
    %s211 = sor.u32 %s209, %s210
    %p212 = scmp.eq.s32.totalorder %s211, 0
    %s214 = sadd.s32 %s213, 1
    %s215 = scalar_select %p212, %s213, %s214
    %p218 = pneg %p212
    %p219 = scmp.eq.s32.totalorder %s14, 1
    %p220 = por %p218, %p219
    %p221 = scmp.ne.s32.totalorder %s213, %s216
    %p222 = scmp.eq.s32.totalorder %s14, 0
    %p223 = por %p221, %p222
    %p224 = scmp.ne.s32.totalorder %s213, %s216
    %p225 = scmp.eq.s32.totalorder %s19, 1
    %p226 = por %p224, %p225
    %p227 = scmp.ne.s32.totalorder %s216, %s217
    %p228 = scmp.eq.s32.totalorder %s19, 0
    %p229 = por %p227, %p228
    %p230 = scmp.ne.s32.totalorder %s216, %s217
    %p231 = scmp.eq.s32.totalorder %s20, 1
    %p232 = por %p230, %p231
    %p234 = scmp.ne.s32.totalorder %s217, %s233
    %p235 = scmp.eq.s32.totalorder %s20, 0
    %p236 = por %p234, %p235
    %p237 = scmp.le.s32.totalorder 1, %s14
    %p238 = scmp.lt.s32.totalorder %s14, 3
    %p239 = pnand %p237, %p238
    %p240 = pneg %p239
    // Predicated region
    $region9: #{model_gradupdate2_forward.1} parent=5 // pred_check
      _
    $region10: #{model_gradupdate2_forward.1} parent=5 // pred_check_branch
      %242 = sbr.rel (%p239) target = $region12
    $region11: #{model_gradupdate2_forward.1} parent=5 // pred_region
      %s243 = ssub.s32 %s14, 1
      // Predicated region
      $region13: #{model_gradupdate2_forward.1} parent=11 // pred_check
        %p244 = pneg %p103
      $region14: #{model_gradupdate2_forward.1} parent=11 // pred_check_branch
        %246 = sbr.rel (%p244) target = $region16
      $region15: #{model_gradupdate2_forward.1} parent=11 // pred_region
        _
      $region16: #{model_gradupdate2_forward.1} parent=11 // pred_fallthru
        _
      // Predicated region
      $region17: #{model_gradupdate2_forward.1} parent=11 // pred_check
        %p247 = pneg %p124
      $region18: #{model_gradupdate2_forward.1} parent=11 // pred_check_branch
        %249 = sbr.rel (%p247) target = $region20
      $region19: #{model_gradupdate2_forward.1} parent=11 // pred_region
        _
      $region20: #{model_gradupdate2_forward.1} parent=11 // pred_fallthru
        _
      // Predicated region
      $region21: #{model_gradupdate2_forward.1} parent=11 // pred_check
        %p250 = pneg %p145
      $region22: #{model_gradupdate2_forward.1} parent=11 // pred_check_branch
        %252 = sbr.rel (%p250) target = $region24
      $region23: #{model_gradupdate2_forward.1} parent=11 // pred_region
        _
      $region24: #{model_gradupdate2_forward.1} parent=11 // pred_fallthru
        _
    $region12: #{model_gradupdate2_forward.1} parent=5 // pred_fallthru
      _
    %p253 = scmp.lt.s32.totalorder %s14, 2
    // Predicated region
    $region25: #{model_gradupdate2_forward.1} parent=5 // pred_check
      %p254 = pneg %p253
    $region26: #{model_gradupdate2_forward.1} parent=5 // pred_check_branch
      %256 = sbr.rel (%p254) target = $region28
    $region27: #{model_gradupdate2_forward.1} parent=5 // pred_region
      // Predicated region
      $region29: #{model_gradupdate2_forward.1} parent=27 // pred_check
        %p257 = pneg %p48
      $region30: #{model_gradupdate2_forward.1} parent=27 // pred_check_branch
        %259 = sbr.rel (%p257) target = $region32
      $region31: #{model_gradupdate2_forward.1} parent=27 // pred_region
        %s260 = smul.u32 2, %s22
        %p261 = scmp.lt.s32.totalorder %s21, 1
        %s262 = scalar_select %p261, %s21, 1
        %p263 = scmp.lt.s32.totalorder %s260, 1
        %s264 = scalar_select %p263, %s260, 1
        %s265 = smul.addr %s262, 54
        %s266 = sadd.s32 %s264, %s265
        %s267 = smul.addr %s266, 8
        %s268 = scalar_lea.vmem %s0, %s267
        %s269 = smul.u32 2, %s22
      $region32: #{model_gradupdate2_forward.1} parent=27 // pred_fallthru
        _
      // Predicated region
      $region33: #{model_gradupdate2_forward.1} parent=27 // pred_check
        %p270 = pneg %p76
      $region34: #{model_gradupdate2_forward.1} parent=27 // pred_check_branch
        %272 = sbr.rel (%p270) target = $region36
      $region35: #{model_gradupdate2_forward.1} parent=27 // pred_region
        %s273 = smul.u32 2, %s22
        %p274 = scmp.lt.s32.totalorder %s21, 1
        %s275 = scalar_select %p274, %s21, 1
        %p276 = scmp.lt.s32.totalorder %s273, 1
        %s277 = scalar_select %p276, %s273, 1
        %s278 = smul.addr %s275, 6
        %s279 = sadd.s32 %s277, %s278
        %s280 = smul.addr %s279, 8
        %s281 = scalar_lea.vmem %s1, %s280
        %s282 = smul.u32 2, %s22
      $region36: #{model_gradupdate2_forward.1} parent=27 // pred_fallthru
        _
    $region28: #{model_gradupdate2_forward.1} parent=5 // pred_fallthru
      _
    %p283 = scmp.le.s32.totalorder 1, %s14
    %p284 = scmp.lt.s32.totalorder %s14, 3
    %p285 = pnand %p283, %p284
    %p286 = pneg %p285
    // Predicated region
    $region37: #{model_gradupdate2_forward.1} parent=5 // pred_check
      _
    $region38: #{model_gradupdate2_forward.1} parent=5 // pred_check_branch
      %288 = sbr.rel (%p285) target = $region40
    $region39: #{model_gradupdate2_forward.1} parent=5 // pred_region
      %s289 = ssub.s32 %s14, 1
      %s290 = smul.u32 2, %s24
      %p291 = scmp.lt.s32.totalorder %s23, 1
      %s292 = scalar_select %p291, %s23, 1
      %p293 = scmp.lt.s32.totalorder %s290, 1
      %s294 = scalar_select %p293, %s290, 1
      %s295 = smul.addr %s292, 54
      %s296 = sadd.s32 %s294, %s295
      %s297 = smul.addr %s296, 8
      %s298 = scalar_lea.vmem %s0, %s297
      %p299 = pneg %p54
      %p300 = pneg %p51
      %s301 = smul.u32 2, %s24
      %p302 = scmp.lt.s32.totalorder %s23, 1
      %s303 = scalar_select %p302, %s23, 1
      %p304 = scmp.lt.s32.totalorder %s301, 1
      %s305 = scalar_select %p304, %s301, 1
      %s306 = smul.addr %s303, 6
      %s307 = sadd.s32 %s305, %s306
      %s308 = smul.addr %s307, 8
      %s309 = scalar_lea.vmem %s1, %s308
      %p310 = pneg %p82
      %p311 = pneg %p79
      %p312 = pneg %p103
      %p313 = pneg %p100
      %p314 = pneg %p124
      %p315 = pneg %p121
      %p316 = pneg %p145
      %p317 = pneg %p142
      %p318 = pneg %p173
      %p319 = pneg %p170
      %s320 = smul.u32 2, %s24
      %p321 = scmp.lt.s32.totalorder %s23, 1
      %s322 = scalar_select %p321, %s23, 1
      %p323 = scmp.lt.s32.totalorder %s320, 1
      %s324 = scalar_select %p323, %s320, 1
      %s325 = smul.addr %s322, 2
      %s326 = sadd.s32 %s324, %s325
      %s327 = smul.addr %s326, 4
      %s328 = scalar_lea.vmem %s5, %s327
      %p329 = pneg %p201
      %p330 = pneg %p198
      %s331 = smul.u32 2, %s24
      %p332 = scmp.lt.s32.totalorder %s23, 1
      %s333 = scalar_select %p332, %s23, 1
      %p334 = scmp.lt.s32.totalorder %s331, 1
      %s335 = scalar_select %p334, %s331, 1
      %s336 = smul.addr %s333, 6
      %s337 = sadd.s32 %s335, %s336
      %s338 = smul.addr %s337, 8
      %s339 = scalar_lea.vmem %s6, %s338
      %p340 = pneg %p229
      %p341 = pneg %p226
      %s342 = smul.u32 2, %s24
      %p343 = scmp.lt.s32.totalorder %s23, 1
      %s344 = scalar_select %p343, %s23, 1
      %p345 = scmp.lt.s32.totalorder %s342, 1
      %s346 = scalar_select %p345, %s342, 1
      %s347 = smul.addr %s344, 6
      %s348 = sadd.s32 %s346, %s347
      %s349 = smul.addr %s348, 8
      %s350 = scalar_lea.vmem %s7, %s349
      %s351 = smul.u32 2, %s24
      %p352 = scmp.lt.s32.totalorder %s23, 1
      %s353 = scalar_select %p352, %s23, 1
      %p354 = scmp.lt.s32.totalorder %s351, 1
      %s355 = scalar_select %p354, %s351, 1
      %s356 = smul.addr %s353, 54
      %s357 = sadd.s32 %s355, %s356
      %s358 = smul.addr %s357, 8
      %s359 = scalar_lea.vmem %s0, %s358
      %s360 = smul.u32 2, %s24
      %s361 = smul.u32 2, %s24
      %p362 = scmp.lt.s32.totalorder %s23, 1
      %s363 = scalar_select %p362, %s23, 1
      %p364 = scmp.lt.s32.totalorder %s361, 1
      %s365 = scalar_select %p364, %s361, 1
      %s366 = smul.addr %s363, 6
      %s367 = sadd.s32 %s365, %s366
      %s368 = smul.addr %s367, 8
      %s369 = scalar_lea.vmem %s1, %s368
      %s370 = smul.u32 2, %s24
      %s371 = smul.u32 2, %s24
      %p372 = scmp.lt.s32.totalorder %s23, 1
      %s373 = scalar_select %p372, %s23, 1
      %p374 = scmp.lt.s32.totalorder %s371, 1
      %s375 = scalar_select %p374, %s371, 1
      %s376 = smul.addr %s373, 2
      %s377 = sadd.s32 %s375, %s376
      %s378 = smul.addr %s377, 4
      %s379 = scalar_lea.vmem %s5, %s378
      %s380 = smul.u32 2, %s24
      %s381 = smul.u32 2, %s24
      %p382 = scmp.lt.s32.totalorder %s23, 1
      %s383 = scalar_select %p382, %s23, 1
      %p384 = scmp.lt.s32.totalorder %s381, 1
      %s385 = scalar_select %p384, %s381, 1
      %s386 = smul.addr %s383, 6
      %s387 = sadd.s32 %s385, %s386
      %s388 = smul.addr %s387, 8
      %s389 = scalar_lea.vmem %s6, %s388
      %s390 = smul.u32 2, %s24
      %s391 = smul.u32 2, %s24
      %p392 = scmp.lt.s32.totalorder %s23, 1
      %s393 = scalar_select %p392, %s23, 1
      %p394 = scmp.lt.s32.totalorder %s391, 1
      %s395 = scalar_select %p394, %s391, 1
      %s396 = smul.addr %s393, 6
      %s397 = sadd.s32 %s395, %s396
      %s398 = smul.addr %s397, 8
      %s399 = scalar_lea.vmem %s7, %s398
      %s400 = smul.u32 2, %s24
      %v401 = vld [vmem:[%s2] sm:$0xff]
      %v402 = vld [vmem:[%s2 + $0x8] sm:$0xff]
      %v403 = vld [vmem:[%s2 + $0x10] sm:$0xff]
      %v404 = vld [vmem:[%s2 + $0x18] sm:$0xff]
      %v405 = vld [vmem:[%s2 + $0x20] sm:$0xff]
      %v406 = vld [vmem:[%s2 + $0x28] sm:$0xff]
      %v407 = vld [vmem:[%s2 + $0x30] sm:$0xff]
      %v408 = vld [vmem:[%s2 + $0x38] sm:$0xff]
      %v409 = vld [vmem:[%s2 + $0x40] sm:$0xff]
      %v410 = vld [vmem:[%s2 + $0x48] sm:$0xff]
      %v411 = vld [vmem:[%s2 + $0x50] sm:$0xff]
      %v412 = vld [vmem:[%s2 + $0x58] sm:$0xff]
      %v413 = vld [vmem:[%s2 + $0x60] sm:$0xff]
      %v414 = vld [vmem:[%s2 + $0x68] sm:$0xff]
      %v415 = vld [vmem:[%s2 + $0x70] sm:$0xff]
      %v416 = vld [vmem:[%s2 + $0x78] sm:$0xff]
      %v417 = vld [vmem:[%s2 + $0x80] sm:$0xff]
      %v418 = vld [vmem:[%s2 + $0x88] sm:$0xff]
      %v419 = vld [vmem:[%s2 + $0x90] sm:$0xff]
      %v420 = vld [vmem:[%s2 + $0x98] sm:$0xff]
      %v421 = vld [vmem:[%s359] sm:$0xff]
      %v422 = vld [vmem:[%s359 + $0x8] sm:$0xff]
      %v423 = vld [vmem:[%s359 + $0x10] sm:$0xff]
      %v424 = vld [vmem:[%s359 + $0x18] sm:$0xff]
      %v425 = vld [vmem:[%s359 + $0x20] sm:$0xff]
      %v426 = vld [vmem:[%s359 + $0x28] sm:$0xff]
      %v427 = vld [vmem:[%s359 + $0x30] sm:$0xff]
      %v428 = vld [vmem:[%s359 + $0x38] sm:$0xff]
      %v429 = vld [vmem:[%s359 + $0x40] sm:$0xff]
      %v430 = vld [vmem:[%s359 + $0x48] sm:$0xff]
      %v431 = vld [vmem:[%s359 + $0x50] sm:$0xff]
      %v432 = vld [vmem:[%s359 + $0x58] sm:$0xff]
      %v433 = vld [vmem:[%s359 + $0x60] sm:$0xff]
      %v434 = vld [vmem:[%s359 + $0x68] sm:$0xff]
      %v435 = vld [vmem:[%s359 + $0x70] sm:$0xff]
      %v436 = vld [vmem:[%s359 + $0x78] sm:$0xff]
      %v437 = vld [vmem:[%s359 + $0x80] sm:$0xff]
      %v438 = vld [vmem:[%s359 + $0x88] sm:$0xff]
      %v439 = vld [vmem:[%s359 + $0x90] sm:$0xff]
      %v440 = vld [vmem:[%s359 + $0x98] sm:$0xff]
      %v441 = vld [vmem:[%s359 + $0xa0] sm:$0xff]
      %v442 = vld [vmem:[%s359 + $0xa8] sm:$0xff]
      %v443 = vld [vmem:[%s359 + $0xb0] sm:$0xff]
      %v444 = vld [vmem:[%s359 + $0xb8] sm:$0xff]
      %v445 = vld [vmem:[%s359 + $0xc0] sm:$0xff]
      %v446 = vld [vmem:[%s359 + $0xc8] sm:$0xff]
      %v447 = vld [vmem:[%s359 + $0xd0] sm:$0xff]
      %v448 = vld [vmem:[%s359 + $0xd8] sm:$0xff]
      %v449 = vld [vmem:[%s359 + $0xe0] sm:$0xff]
      %v450 = vld [vmem:[%s359 + $0xe8] sm:$0xff]
      %v451 = vld [vmem:[%s359 + $0xf0] sm:$0xff]
      %v452 = vld [vmem:[%s359 + $0xf8] sm:$0xff]
      %v453 = vld [vmem:[%s359 + $0x100] sm:$0xff]
      %v454 = vld [vmem:[%s359 + $0x108] sm:$0xff]
      %v455 = vld [vmem:[%s359 + $0x110] sm:$0xff]
      %v456 = vld [vmem:[%s359 + $0x118] sm:$0xff]
      %v457 = vld [vmem:[%s359 + $0x120] sm:$0xff]
      %v458 = vld [vmem:[%s359 + $0x128] sm:$0xff]
      %v459 = vld [vmem:[%s359 + $0x130] sm:$0xff]
      %v460 = vld [vmem:[%s359 + $0x138] sm:$0xff]
      %v461 = vld [vmem:[%s359 + $0x140] sm:$0xff]
      %v462 = vld [vmem:[%s359 + $0x148] sm:$0xff]
      %v463 = vld [vmem:[%s359 + $0x150] sm:$0xff]
      %v464 = vld [vmem:[%s359 + $0x158] sm:$0xff]
      %v465 = vld [vmem:[%s359 + $0x160] sm:$0xff]
      %v466 = vld [vmem:[%s359 + $0x168] sm:$0xff]
      %v467 = vld [vmem:[%s359 + $0x170] sm:$0xff]
      %v468 = vld [vmem:[%s359 + $0x178] sm:$0xff]
      %v469 = vld [vmem:[%s359 + $0x180] sm:$0xff]
      %v470 = vld [vmem:[%s359 + $0x188] sm:$0xff]
      %v471 = vld [vmem:[%s359 + $0x190] sm:$0xff]
      %v472 = vld [vmem:[%s359 + $0x198] sm:$0xff]
      %v473 = vld [vmem:[%s359 + $0x1a0] sm:$0xff]
      %v474 = vld [vmem:[%s359 + $0x1a8] sm:$0xff]
      %v475 = vld [vmem:[%s3] sm:$0xff]
      %v476 = vld [vmem:[%s3 + $0x8] sm:$0xff]
      %v477 = vld [vmem:[%s3 + $0x10] sm:$0xff]
      %v478 = vld [vmem:[%s3 + $0x18] sm:$0xff]
      %v479 = vld [vmem:[%s3 + $0x20] sm:$0xff]
      %v480 = vld [vmem:[%s3 + $0x28] sm:$0xff]
      %v481 = vld [vmem:[%s3 + $0x30] sm:$0xff]
      %v482 = vld [vmem:[%s3 + $0x38] sm:$0xff]
      %v483 = vld [vmem:[%s3 + $0x40] sm:$0xff]
      %v484 = vld [vmem:[%s3 + $0x48] sm:$0xff]
      %486 = vset.pattern.permute.xlu0 0
      %487 = vperm.xlu0 %486, %v475
      %v488 = vpop.permute.xlu0 %487
      %491 = vset.pattern.permute.xlu0 0
      %492 = vperm.xlu0 %491, %v476
      %v493 = vpop.permute.xlu0 %492
      %496 = vset.pattern.permute.xlu0 0
      %497 = vperm.xlu0 %496, %v477
      %v498 = vpop.permute.xlu0 %497
      %501 = vset.pattern.permute.xlu0 0
      %502 = vperm.xlu0 %501, %v478
      %v503 = vpop.permute.xlu0 %502
      %506 = vset.pattern.permute.xlu0 0
      %507 = vperm.xlu0 %506, %v479
      %v508 = vpop.permute.xlu0 %507
      %511 = vset.pattern.permute.xlu0 0
      %512 = vperm.xlu0 %511, %v480
      %v513 = vpop.permute.xlu0 %512
      %516 = vset.pattern.permute.xlu0 0
      %517 = vperm.xlu0 %516, %v481
      %v518 = vpop.permute.xlu0 %517
      %521 = vset.pattern.permute.xlu0 0
      %522 = vperm.xlu0 %521, %v482
      %v523 = vpop.permute.xlu0 %522
      %526 = vset.pattern.permute.xlu0 0
      %527 = vperm.xlu0 %526, %v483
      %v528 = vpop.permute.xlu0 %527
      %531 = vset.pattern.permute.xlu0 0
      %532 = vperm.xlu0 %531, %v484
      %v533 = vpop.permute.xlu0 %532
      %vm535 = vcmask 719872
      %v537 = vsel %vm535, %v402, 0
      %v540 = vsel %vm535, %v404, 0
      %v543 = vsel %vm535, %v406, 0
      %v546 = vsel %vm535, %v408, 0
      %v549 = vsel %vm535, %v410, 0
      %v552 = vsel %vm535, %v412, 0
      %v555 = vsel %vm535, %v414, 0
      %v558 = vsel %vm535, %v416, 0
      %v561 = vsel %vm535, %v418, 0
      %v564 = vsel %vm535, %v420, 0
      %566 = vmatprep.subr.mxu0 %v452
      %567 = vmatpush1.msra.mxu0 %v451
      %568 = vmatprep.subr.mxu0 %v450
      %569 = vmatpush1.msra.mxu0 %v449
      %570 = vmatprep.subr.mxu0 %v448
      %571 = vmatpush1.msra.mxu0 %v447
      %572 = vmatprep.subr.mxu0 %v446
      %573 = vmatpush1.msra.mxu0 %v445
      %574 = vmatprep.subr.mxu0 %v444
      %575 = vmatpush1.msra.mxu0 %v443
      %576 = vmatprep.subr.mxu0 %v442
      %577 = vmatpush1.msra.mxu0 %v441
      %578 = vmatprep.subr.mxu0 %v440
      %579 = vmatpush1.msra.mxu0 %v439
      %580 = vmatprep.subr.mxu0 %v438
      %581 = vmatpush1.msra.mxu0 %v437
      %582 = vmatprep.subr.mxu0 %v436
      %583 = vmatpush1.msra.mxu0 %v435
      %584 = vmatprep.subr.mxu0 %v434
      %585 = vmatpush1.msra.mxu0 %v433
      %586 = vmatprep.subr.mxu0 %v432
      %587 = vmatpush1.msra.mxu0 %v431
      %588 = vmatprep.subr.mxu0 %v430
      %589 = vmatpush1.msra.mxu0 %v429
      %590 = vmatprep.subr.mxu0 %v428
      %591 = vmatpush1.msra.mxu0 %v427
      %592 = vmatprep.subr.mxu0 %v426
      %593 = vmatpush1.msra.mxu0 %v425
      %594 = vmatprep.subr.mxu0 %v424
      %595 = vmatpush1.msra.mxu0 %v423
      %596 = vmatprep.subr.mxu0 %v422
      %597 = vmatpush1.msra.mxu0 %v421
      %598 = vmatprep.subr.mxu0 0.0
      %599 = vmatpush2.msra.mxu0 0.0
      %600 = vmatprep.subr.mxu0 0.0
      %601 = vmatpush2.msra.mxu0 0.0
      %602 = vmatprep.subr.mxu0 0.0
      %603 = vmatpush2.msra.mxu0 0.0
      %604 = vmatprep.subr.mxu0 0.0
      %605 = vmatpush2.msra.mxu0 0.0
      %606 = vmatprep.subr.mxu0 0.0
      %607 = vmatpush2.msra.mxu0 0.0
      %608 = vmatprep.subr.mxu0 %v474
      %609 = vmatpush2.msra.mxu0 %v473
      %610 = vmatprep.subr.mxu0 %v472
      %611 = vmatpush2.msra.mxu0 %v471
      %612 = vmatprep.subr.mxu0 %v470
      %613 = vmatpush2.msra.mxu0 %v469
      %614 = vmatprep.subr.mxu0 %v468
      %615 = vmatpush2.msra.mxu0 %v467
      %616 = vmatprep.subr.mxu0 %v466
      %617 = vmatpush2.msra.mxu0 %v465
      %618 = vmatprep.subr.mxu0 %v464
      %619 = vmatpush2.msra.mxu0 %v463
      %620 = vmatprep.subr.mxu0 %v462
      %621 = vmatpush2.msra.mxu0 %v461
      %622 = vmatprep.subr.mxu0 %v460
      %623 = vmatpush2.msra.mxu0 %v459
      %624 = vmatprep.subr.mxu0 %v458
      %625 = vmatpush2.msra.mxu0 %v457
      %626 = vmatprep.subr.mxu0 %v456
      %627 = vmatpush2.msra.mxu0 %v455
      %628 = vmatprep.subr.mxu0 %v454
      %629 = vmatpush2.msra.mxu0 %v453
      %630 = vmatprep.mubr.f32.mxu0 %v537
      %631 = vmatmul.mubr.f32.gmra.mxu0 %v401
      %v632 = vpop.f32.mrf.mxu0
      %v633 = vadd.f32 %v488, %v632
      %v634 = vpop.f32.mrf.mxu0
      %v635 = vadd.f32 %v488, %v634
      %636 = vmatprep.mubr.f32.mxu0 %v540
      %637 = vmatmul.mubr.f32.gmra.mxu0 %v403
      %v638 = vpop.f32.mrf.mxu0
      %v639 = vadd.f32 %v493, %v638
      %v640 = vpop.f32.mrf.mxu0
      %v641 = vadd.f32 %v493, %v640
      %642 = vmatprep.mubr.f32.mxu0 %v543
      %643 = vmatmul.mubr.f32.gmra.mxu0 %v405
      %v644 = vpop.f32.mrf.mxu0
      %v645 = vadd.f32 %v498, %v644
      %v646 = vpop.f32.mrf.mxu0
      %v647 = vadd.f32 %v498, %v646
      %648 = vmatprep.mubr.f32.mxu0 %v546
      %649 = vmatmul.mubr.f32.gmra.mxu0 %v407
      %v650 = vpop.f32.mrf.mxu0
      %v651 = vadd.f32 %v503, %v650
      %v652 = vpop.f32.mrf.mxu0
      %v653 = vadd.f32 %v503, %v652
      %654 = vmatprep.mubr.f32.mxu0 %v549
      %655 = vmatmul.mubr.f32.gmra.mxu0 %v409
      %v656 = vpop.f32.mrf.mxu0
      %v657 = vadd.f32 %v508, %v656
      %v658 = vpop.f32.mrf.mxu0
      %v659 = vadd.f32 %v508, %v658
      %660 = vmatprep.mubr.f32.mxu0 %v552
      %661 = vmatmul.mubr.f32.gmra.mxu0 %v411
      %v662 = vpop.f32.mrf.mxu0
      %v663 = vadd.f32 %v513, %v662
      %v664 = vpop.f32.mrf.mxu0
      %v665 = vadd.f32 %v513, %v664
      %666 = vmatprep.mubr.f32.mxu0 %v555
      %667 = vmatmul.mubr.f32.gmra.mxu0 %v413
      %v668 = vpop.f32.mrf.mxu0
      %v669 = vadd.f32 %v518, %v668
      %v670 = vpop.f32.mrf.mxu0
      %v671 = vadd.f32 %v518, %v670
      %672 = vmatprep.mubr.f32.mxu0 %v558
      %673 = vmatmul.mubr.f32.gmra.mxu0 %v415
      %v674 = vpop.f32.mrf.mxu0
      %v675 = vadd.f32 %v523, %v674
      %v676 = vpop.f32.mrf.mxu0
      %v677 = vadd.f32 %v523, %v676
      %678 = vmatprep.mubr.f32.mxu0 %v561
      %679 = vmatmul.mubr.f32.gmra.mxu0 %v417
      %v680 = vpop.f32.mrf.mxu0
      %v681 = vadd.f32 %v528, %v680
      %v682 = vpop.f32.mrf.mxu0
      %v683 = vadd.f32 %v528, %v682
      %684 = vmatprep.mubr.f32.mxu0 %v564
      %685 = vmatmul.mubr.f32.gmra.mxu0 %v419
      %v686 = vpop.f32.mrf.mxu0
      %v687 = vadd.f32 %v533, %v686
      %v688 = vpop.f32.mrf.mxu0
      %v689 = vadd.f32 %v533, %v688
      %690 = vdwg.mxu0
      %v691 = vxor.u32 %v633, 2147483648
      %v692 = vxor.u32 %v635, 2147483648
      %v693 = vxor.u32 %v639, 2147483648
      %v694 = vxor.u32 %v641, 2147483648
      %v695 = vxor.u32 %v645, 2147483648
      %v696 = vxor.u32 %v647, 2147483648
      %v697 = vmul.f32 %v691, 1.442695
      %v698 = vpow.pop %v697
      %v699 = vmul.f32 %v692, 1.442695
      %v700 = vpow.pop %v699
      %v701 = vmul.f32 %v693, 1.442695
      %v702 = vpow.pop %v701
      %v703 = vmul.f32 %v694, 1.442695
      %v704 = vpow.pop %v703
      %v705 = vmul.f32 %v695, 1.442695
      %v706 = vpow.pop %v705
      %v707 = vmul.f32 %v696, 1.442695
      %v708 = vpow.pop %v707
      %v709 = vadd.f32 %v698, 1.0
      %v710 = vadd.f32 %v700, 1.0
      %v711 = vadd.f32 %v702, 1.0
      %v712 = vadd.f32 %v704, 1.0
      %v713 = vadd.f32 %v706, 1.0
      %v714 = vadd.f32 %v708, 1.0
      %v715 = vrcp.pop %v709
      %v716 = vmul.f32 1.0, %v715
      %v717 = vrcp.pop %v710
      %v718 = vmul.f32 1.0, %v717
      %v719 = vrcp.pop %v711
      %v720 = vmul.f32 1.0, %v719
      %v721 = vrcp.pop %v712
      %v722 = vmul.f32 1.0, %v721
      %v723 = vrcp.pop %v713
      %v724 = vmul.f32 1.0, %v723
      %v725 = vrcp.pop %v714
      %v726 = vmul.f32 1.0, %v725
      %v727 = vxor.u32 %v651, 2147483648
      %v728 = vxor.u32 %v653, 2147483648
      %v729 = vxor.u32 %v657, 2147483648
      %v730 = vxor.u32 %v659, 2147483648
      %v731 = vmul.f32 %v727, 1.442695
      %v732 = vpow.pop %v731
      %v733 = vmul.f32 %v728, 1.442695
      %v734 = vpow.pop %v733
      %v735 = vmul.f32 %v729, 1.442695
      %v736 = vpow.pop %v735
      %v737 = vmul.f32 %v730, 1.442695
      %v738 = vpow.pop %v737
      %v739 = vadd.f32 %v732, 1.0
      %v740 = vadd.f32 %v734, 1.0
      %v741 = vadd.f32 %v736, 1.0
      %v742 = vadd.f32 %v738, 1.0
      %v743 = vrcp.pop %v739
      %v744 = vmul.f32 1.0, %v743
      %v745 = vrcp.pop %v740
      %v746 = vmul.f32 1.0, %v745
      %v747 = vrcp.pop %v741
      %v748 = vmul.f32 1.0, %v747
      %v749 = vrcp.pop %v742
      %v750 = vmul.f32 1.0, %v749
      %v751 = vxor.u32 %v663, 2147483648
      %v752 = vxor.u32 %v665, 2147483648
      %v753 = vxor.u32 %v669, 2147483648
      %v754 = vxor.u32 %v671, 2147483648
      %v755 = vxor.u32 %v675, 2147483648
      %v756 = vxor.u32 %v677, 2147483648
      %v757 = vmul.f32 %v751, 1.442695
      %v758 = vpow.pop %v757
      %v759 = vmul.f32 %v752, 1.442695
      %v760 = vpow.pop %v759
      %v761 = vmul.f32 %v753, 1.442695
      %v762 = vpow.pop %v761
      %v763 = vmul.f32 %v754, 1.442695
      %v764 = vpow.pop %v763
      %v765 = vmul.f32 %v755, 1.442695
      %v766 = vpow.pop %v765
      %v767 = vmul.f32 %v756, 1.442695
      %v768 = vpow.pop %v767
      %v769 = vadd.f32 %v758, 1.0
      %v770 = vadd.f32 %v760, 1.0
      %v771 = vadd.f32 %v762, 1.0
      %v772 = vadd.f32 %v764, 1.0
      %v773 = vadd.f32 %v766, 1.0
      %v774 = vadd.f32 %v768, 1.0
      %v775 = vrcp.pop %v769
      %v776 = vmul.f32 1.0, %v775
      %v777 = vrcp.pop %v770
      %v778 = vmul.f32 1.0, %v777
      %v779 = vrcp.pop %v771
      %v780 = vmul.f32 1.0, %v779
      %v781 = vrcp.pop %v772
      %v782 = vmul.f32 1.0, %v781
      %v783 = vrcp.pop %v773
      %v784 = vmul.f32 1.0, %v783
      %v785 = vrcp.pop %v774
      %v786 = vmul.f32 1.0, %v785
      %v787 = vtanh.pop %v675
      %v788 = vtanh.pop %v677
      %v789 = vtanh.pop %v681
      %v790 = vtanh.pop %v683
      %v791 = vtanh.pop %v687
      %v792 = vtanh.pop %v689
      %v793 = vld [vmem:[%s369] sm:$0xff]
      %v794 = vld [vmem:[%s369 + $0x8] sm:$0xff]
      %v795 = vld [vmem:[%s369 + $0x10] sm:$0xff]
      %v796 = vld [vmem:[%s369 + $0x18] sm:$0xff]
      %v797 = vld [vmem:[%s369 + $0x20] sm:$0xf]
      %v798 = vld [vmem:[%s369 + $0x28] sm:$0xf]
      %vm805 = vcmask 1043456
      %v806 = vrot.slane %v793, 4
      %v807 = vrot.slane %v794, 4
      %v808 = vrot.slane %v795, 4
      %v809 = vsel %vm805, %v806, %v808
      %v810 = vrot.slane %v796, 4
      %v811 = vsel %vm805, %v807, %v810
      %v812 = vrot.slane %v797, 4
      %v813 = vsel %vm805, %v808, %v812
      %v814 = vrot.slane %v798, 4
      %v815 = vsel %vm805, %v810, %v814
      %v822 = vmul.f32 %v724, %v806
      %v823 = vmul.f32 %v726, %v807
      %v824 = vmul.f32 %v744, %v809
      %v825 = vmul.f32 %v746, %v811
      %v826 = vmul.f32 %v748, %v813
      %v827 = vmul.f32 %v750, %v815
      %v834 = vrot.slane %v787, 4
      %v835 = vrot.slane %v789, 4
      %v836 = vsel %vm805, %v834, %v835
      %v837 = vrot.slane %v788, 4
      %v838 = vrot.slane %v790, 4
      %v839 = vsel %vm805, %v837, %v838
      %v840 = vrot.slane %v791, 4
      %v841 = vsel %vm805, %v835, %v840
      %v842 = vrot.slane %v792, 4
      %v843 = vsel %vm805, %v838, %v842
      %v850 = vmul.f32 %v716, %v836
      %v851 = vmul.f32 %v718, %v839
      %v852 = vmul.f32 %v720, %v841
      %v853 = vmul.f32 %v722, %v843
      %v854 = vmul.f32 %v724, %v840
      %v855 = vmul.f32 %v726, %v842
      %v862 = vrot.slane %v850, 4
      %v863 = vrot.slane %v851, 4
      %v864 = vrot.slane %v852, 4
      %v865 = vsel %vm805, %v862, %v864
      %v866 = vrot.slane %v853, 4
      %v867 = vsel %vm805, %v863, %v866
      %v868 = vrot.slane %v854, 4
      %v869 = vsel %vm805, %v864, %v868
      %v870 = vrot.slane %v855, 4
      %v871 = vsel %vm805, %v866, %v870
      %v878 = vadd.f32 %v822, %v862
      %v879 = vadd.f32 %v823, %v863
      %v880 = vadd.f32 %v824, %v865
      %v881 = vadd.f32 %v825, %v867
      %v882 = vadd.f32 %v826, %v869
      %v883 = vadd.f32 %v827, %v871
      %v884 = vtanh.pop %v878
      %v885 = vtanh.pop %v879
      %v886 = vtanh.pop %v880
      %v887 = vtanh.pop %v881
      %v888 = vtanh.pop %v882
      %v889 = vtanh.pop %v883
      %v896 = vrot.slane %v884, 4
      %v897 = vrot.slane %v886, 4
      %v898 = vsel %vm805, %v896, %v897
      %v899 = vrot.slane %v885, 4
      %v900 = vrot.slane %v887, 4
      %v901 = vsel %vm805, %v899, %v900
      %v902 = vrot.slane %v888, 4
      %v903 = vsel %vm805, %v897, %v902
      %v904 = vrot.slane %v889, 4
      %v905 = vsel %vm805, %v900, %v904
      %v912 = vmul.f32 %v776, %v898
      %v913 = vmul.f32 %v778, %v901
      %v914 = vmul.f32 %v780, %v903
      %v915 = vmul.f32 %v782, %v905
      %v916 = vmul.f32 %v784, %v902
      %v917 = vmul.f32 %v786, %v904
      %v918 = vld [vmem:[%s4] sm:$0xf]
      %vm919 = vcmask 162816
      %v921 = vsel %vm919, %v918, 0
      %v924 = vsel %vm805, %v916, 0
      %v927 = vsel %vm805, %v917, 0
      %929 = vmatprep.subr.mxu0 0.0
      %930 = vmatpush1.msra.mxu0 0.0
      %931 = vmatprep.subr.mxu0 0.0
      %932 = vmatpush1.msra.mxu0 0.0
      %933 = vmatprep.subr.mxu0 0.0
      %934 = vmatpush1.msra.mxu0 0.0
      %935 = vmatprep.subr.mxu0 0.0
      %936 = vmatpush1.msra.mxu0 0.0
      %937 = vmatprep.subr.mxu0 0.0
      %938 = vmatpush1.msra.mxu0 0.0
      %939 = vmatprep.subr.mxu0 0.0
      %940 = vmatpush1.msra.mxu0 0.0
      %941 = vmatprep.subr.mxu0 0.0
      %942 = vmatpush1.msra.mxu0 0.0
      %943 = vmatprep.subr.mxu0 0.0
      %944 = vmatpush1.msra.mxu0 0.0
      %945 = vmatprep.subr.mxu0 0.0
      %946 = vmatpush1.msra.mxu0 0.0
      %947 = vmatprep.subr.mxu0 0.0
      %948 = vmatpush1.msra.mxu0 0.0
      %949 = vmatprep.subr.mxu0 0.0
      %950 = vmatpush1.msra.mxu0 0.0
      %951 = vmatprep.subr.mxu0 0.0
      %952 = vmatpush1.msra.mxu0 0.0
      %953 = vmatprep.subr.mxu0 0.0
      %954 = vmatpush1.msra.mxu0 0.0
      %955 = vmatprep.subr.mxu0 %v927
      %956 = vmatpush1.msra.mxu0 %v924
      %957 = vmatprep.subr.mxu0 %v915
      %958 = vmatpush1.msra.mxu0 %v914
      %959 = vmatprep.subr.mxu0 %v913
      %960 = vmatpush1.msra.mxu0 %v912
      %961 = vmatprep.subr.mxu0 0.0
      %962 = vmatpush2.msra.mxu0 0.0
      %963 = vmatprep.subr.mxu0 0.0
      %964 = vmatpush2.msra.mxu0 0.0
      %965 = vmatprep.subr.mxu0 0.0
      %966 = vmatpush2.msra.mxu0 0.0
      %967 = vmatprep.subr.mxu0 0.0
      %968 = vmatpush2.msra.mxu0 0.0
      %969 = vmatprep.subr.mxu0 0.0
      %970 = vmatpush2.msra.mxu0 0.0
      %971 = vmatprep.subr.mxu0 0.0
      %972 = vmatpush2.msra.mxu0 0.0
      %973 = vmatprep.subr.mxu0 0.0
      %974 = vmatpush2.msra.mxu0 0.0
      %975 = vmatprep.subr.mxu0 0.0
      %976 = vmatpush2.msra.mxu0 0.0
      %977 = vmatprep.subr.mxu0 0.0
      %978 = vmatpush2.msra.mxu0 0.0
      %979 = vmatprep.subr.mxu0 0.0
      %980 = vmatpush2.msra.mxu0 0.0
      %981 = vmatprep.subr.mxu0 0.0
      %982 = vmatpush2.msra.mxu0 0.0
      %983 = vmatprep.subr.mxu0 0.0
      %984 = vmatpush2.msra.mxu0 0.0
      %985 = vmatprep.subr.mxu0 0.0
      %986 = vmatpush2.msra.mxu0 0.0
      %987 = vmatprep.subr.mxu0 0.0
      %988 = vmatpush2.msra.mxu0 0.0
      %989 = vmatprep.subr.mxu0 0.0
      %990 = vmatpush2.msra.mxu0 0.0
      %991 = vmatprep.subr.mxu0 0.0
      %992 = vmatpush2.msra.mxu0 0.0
      %993 = vmatprep.mubr.f32.mxu0 0.0
      %994 = vmatmul.mubr.f32.gmra.mxu0 %v921
      %v995 = vpop.f32.mrf.mxu0
      %v996 = vadd.f32 0.0, %v995
      %v997 = vpop.f32.mrf.mxu0
      %v998 = vadd.f32 0.0, %v997
      %999 = vdwg.mxu0
      %v1002 = vcombine.low %v996, %v998
      %1004 = vst [vmem:[%s379] sm:$0xff] %v1002
      %1005 = vst [vmem:[%s389] sm:$0xff] %v912
      %1006 = vst [vmem:[%s389 + $0x8] sm:$0xff] %v913
      %1007 = vst [vmem:[%s389 + $0x10] sm:$0xff] %v914
      %1008 = vst [vmem:[%s389 + $0x18] sm:$0xff] %v915
      %1009 = vst [vmem:[%s389 + $0x20] sm:$0xf] %v916
      %1010 = vst [vmem:[%s389 + $0x28] sm:$0xf] %v917
      %v1017 = vrot.slane %v878, 4
      %v1018 = vrot.slane %v880, 4
      %v1019 = vsel %vm805, %v1017, %v1018
      %v1020 = vrot.slane %v879, 4
      %v1021 = vrot.slane %v881, 4
      %v1022 = vsel %vm805, %v1020, %v1021
      %v1023 = vrot.slane %v882, 4
      %v1024 = vsel %vm805, %v1018, %v1023
      %v1025 = vrot.slane %v883, 4
      %v1026 = vsel %vm805, %v1021, %v1025
      %1033 = vst [vmem:[%s399] sm:$0xff] %v1019
      %1034 = vst [vmem:[%s399 + $0x8] sm:$0xff] %v1022
      %1035 = vst [vmem:[%s399 + $0x10] sm:$0xff] %v1024
      %1036 = vst [vmem:[%s399 + $0x18] sm:$0xff] %v1026
      %1037 = vst [vmem:[%s399 + $0x20] sm:$0xf] %v1023
      %1038 = vst [vmem:[%s399 + $0x28] sm:$0xf] %v1025
      %s1039 = smul.u32 2, %s24
      %p1040 = scmp.lt.s32.totalorder %s23, 1
      %s1041 = scalar_select %p1040, %s23, 1
      %p1042 = scmp.lt.s32.totalorder %s1039, 1
      %s1043 = scalar_select %p1042, %s1039, 1
      %s1044 = smul.addr %s1041, 2
      %s1045 = sadd.s32 %s1043, %s1044
      %s1046 = smul.addr %s1045, 4
      %s1047 = scalar_lea.vmem %s5, %s1046
      %s1048 = smul.u32 2, %s24
      %p1049 = scmp.lt.s32.totalorder %s23, 1
      %s1050 = scalar_select %p1049, %s23, 1
      %p1051 = scmp.lt.s32.totalorder %s1048, 1
      %s1052 = scalar_select %p1051, %s1048, 1
      %s1053 = smul.addr %s1050, 6
      %s1054 = sadd.s32 %s1052, %s1053
      %s1055 = smul.addr %s1054, 8
      %s1056 = scalar_lea.vmem %s6, %s1055
      %s1057 = smul.u32 2, %s24
      %p1058 = scmp.lt.s32.totalorder %s23, 1
      %s1059 = scalar_select %p1058, %s23, 1
      %p1060 = scmp.lt.s32.totalorder %s1057, 1
      %s1061 = scalar_select %p1060, %s1057, 1
      %s1062 = smul.addr %s1059, 6
      %s1063 = sadd.s32 %s1061, %s1062
      %s1064 = smul.addr %s1063, 8
      %s1065 = scalar_lea.vmem %s7, %s1064
      // Predicated region
      $region41: #{model_gradupdate2_forward.1} parent=39 // pred_check
        %p1066 = pneg %p170
      $region42: #{model_gradupdate2_forward.1} parent=39 // pred_check_branch
        %1068 = sbr.rel (%p1066) target = $region44
      $region43: #{model_gradupdate2_forward.1} parent=39 // pred_region
        %s1069 = smul.u32 2, %s24
      $region44: #{model_gradupdate2_forward.1} parent=39 // pred_fallthru
        _
      // Predicated region
      $region45: #{model_gradupdate2_forward.1} parent=39 // pred_check
        %p1070 = pneg %p198
      $region46: #{model_gradupdate2_forward.1} parent=39 // pred_check_branch
        %1072 = sbr.rel (%p1070) target = $region48
      $region47: #{model_gradupdate2_forward.1} parent=39 // pred_region
        %s1073 = smul.u32 2, %s24
      $region48: #{model_gradupdate2_forward.1} parent=39 // pred_fallthru
        _
      // Predicated region
      $region49: #{model_gradupdate2_forward.1} parent=39 // pred_check
        %p1074 = pneg %p226
      $region50: #{model_gradupdate2_forward.1} parent=39 // pred_check_branch
        %1076 = sbr.rel (%p1074) target = $region52
      $region51: #{model_gradupdate2_forward.1} parent=39 // pred_region
        %s1077 = smul.u32 2, %s24
      $region52: #{model_gradupdate2_forward.1} parent=39 // pred_fallthru
        _
    $region40: #{model_gradupdate2_forward.1} parent=5 // pred_fallthru
      _
    %p1078 = scmp.le.s32.totalorder 2, %s14
    // Predicated region
    $region53: #{model_gradupdate2_forward.1} parent=5 // pred_check
      %p1079 = pneg %p1078
    $region54: #{model_gradupdate2_forward.1} parent=5 // pred_check_branch
      %1081 = sbr.rel (%p1079) target = $region56
    $region55: #{model_gradupdate2_forward.1} parent=5 // pred_region
      %s1082 = ssub.s32 %s14, 2
      // Predicated region
      $region57: #{model_gradupdate2_forward.1} parent=55 // pred_check
        %p1083 = pneg %p176
      $region58: #{model_gradupdate2_forward.1} parent=55 // pred_check_branch
        %1085 = sbr.rel (%p1083) target = $region60
      $region59: #{model_gradupdate2_forward.1} parent=55 // pred_region
        %s1086 = smul.u32 2, %s26
        %p1087 = scmp.lt.s32.totalorder %s25, 1
        %s1088 = scalar_select %p1087, %s25, 1
        %p1089 = scmp.lt.s32.totalorder %s1086, 1
        %s1090 = scalar_select %p1089, %s1086, 1
        %s1091 = smul.addr %s1088, 2
        %s1092 = sadd.s32 %s1090, %s1091
        %s1093 = smul.addr %s1092, 4
        %s1094 = scalar_lea.vmem %s5, %s1093
      $region60: #{model_gradupdate2_forward.1} parent=55 // pred_fallthru
        _
      // Predicated region
      $region61: #{model_gradupdate2_forward.1} parent=55 // pred_check
        %p1095 = pneg %p204
      $region62: #{model_gradupdate2_forward.1} parent=55 // pred_check_branch
        %1097 = sbr.rel (%p1095) target = $region64
      $region63: #{model_gradupdate2_forward.1} parent=55 // pred_region
        %s1098 = smul.u32 2, %s26
        %p1099 = scmp.lt.s32.totalorder %s25, 1
        %s1100 = scalar_select %p1099, %s25, 1
        %p1101 = scmp.lt.s32.totalorder %s1098, 1
        %s1102 = scalar_select %p1101, %s1098, 1
        %s1103 = smul.addr %s1100, 6
        %s1104 = sadd.s32 %s1102, %s1103
        %s1105 = smul.addr %s1104, 8
        %s1106 = scalar_lea.vmem %s6, %s1105
      $region64: #{model_gradupdate2_forward.1} parent=55 // pred_fallthru
        _
      // Predicated region
      $region65: #{model_gradupdate2_forward.1} parent=55 // pred_check
        %p1107 = pneg %p232
      $region66: #{model_gradupdate2_forward.1} parent=55 // pred_check_branch
        %1109 = sbr.rel (%p1107) target = $region68
      $region67: #{model_gradupdate2_forward.1} parent=55 // pred_region
        %s1110 = smul.u32 2, %s26
        %p1111 = scmp.lt.s32.totalorder %s25, 1
        %s1112 = scalar_select %p1111, %s25, 1
        %p1113 = scmp.lt.s32.totalorder %s1110, 1
        %s1114 = scalar_select %p1113, %s1110, 1
        %s1115 = smul.addr %s1112, 6
        %s1116 = sadd.s32 %s1114, %s1115
        %s1117 = smul.addr %s1116, 8
        %s1118 = scalar_lea.vmem %s7, %s1117
      $region68: #{model_gradupdate2_forward.1} parent=55 // pred_fallthru
        _
    $region56: #{model_gradupdate2_forward.1} parent=5 // pred_fallthru
      _
  $region6: #{model_gradupdate2_forward.1} parent=0 // loop_footer
    %s18 = sadd.s32 1, %s14
  $region7: #{model_gradupdate2_forward.1} parent=0 // loop_footer_branch
    %13 = sbr.rel target = $region3
  $region8: #{model_gradupdate2_forward.1} parent=0 // loop_exit
    _

</llo_original>
